<compile_context>
chip_gen: v5e
topology: v5e:2x2
jax: 0.10.0
libtpu: 0.0.40
codegen_flags: <defaults>
</compile_context>

<pallas_src>
import jax
import jax.numpy as jnp
from jax.experimental import pallas as pl
from jax.experimental.pallas import tpu as pltpu

_LANE = 128                    # vreg lane width
_SUBLANE = 8                   # f32 sublane count
_ITEM = 4                      # f32 bytes
_MIN_GRID_BLOCKS = 8           # keep both v7x TensorCores + the pipeline fed
_MIN_TILE_BYTES = 512 * 1024   # don't shrink tiles below this for parallelism


def _vmem_budget():
    """(per-array tile byte budget, explicit scoped-VMEM limit), per chip gen.

    5 full-size arrays (1 in + 4 out) are double-buffered by the pipeline, so
    the working set is ~10x the per-array tile; keep 25% headroom for Mosaic.
    """
    try:
        cap = pltpu.get_tpu_info().vmem_capacity_bytes
    except Exception:
        cap = 64 << 20                       # conservative: assume v7x-sized VMEM
    vmem_limit = min(96 << 20, (cap * 3) // 4)   # 48 MiB on v7x, 96 MiB on v5e/v6e
    tile_budget = max(1 << 20, vmem_limit // 12)  # 4 MiB on v7x, 8 MiB on v5e/v6e
    return tile_budget, vmem_limit


def _round_down(v, m):
    return max(m, (v // m) * m)


def _choose_block(B, N, tile_budget):
    """Pick a lane-dense (tb, tn) tile.

    Prefer full rows (tn == N -> contiguous HBM DMA, no ragged column block),
    size tb to the per-array byte budget, then shrink (tb first, then tn)
    until the grid has >= _MIN_GRID_BLOCKS blocks or the tile would fall below
    the DMA-efficiency floor.  tb stays a multiple of 8 or == B; tn stays a
    multiple of 128 or == N (partial boundary tiles are masked by Pallas).
    """
    rows = min(B, _SUBLANE)
    if _ITEM * rows * N <= tile_budget or N <= _LANE:
        tn = N
    else:
        tn = _round_down(tile_budget // (_ITEM * rows), _LANE)
    max_rows = max(1, tile_budget // (_ITEM * tn))
    tb = B if B <= max_rows else _round_down(max_rows, _SUBLANE)
    tb = B if tb >= B else tb
    tn = N if tn >= N else tn

    def n_blocks(b, n):
        return pl.cdiv(B, b) * pl.cdiv(N, n)

    for _ in range(32):
        if n_blocks(tb, tn) >= _MIN_GRID_BLOCKS or _ITEM * tb * tn <= _MIN_TILE_BYTES:
            break
        if tb > _SUBLANE:                       # split the batch dim first
            tb = _round_down(tb // 2, _SUBLANE)
        elif tn > _LANE:                        # then the lane dim
            tn = _round_down(tn // 2, _LANE)
        else:
            break
    return tb, tn


# --------------------------------------------------------------------------
# Fused kernel: eps drawn from the on-chip PRNG (1 read + 4 write passes).
# --------------------------------------------------------------------------
def _fused_rng_kernel(seed_ref, abar_ref, x_ref,
                      noisy_ref, eps_ref, first_ref, second_ref):
    # Independent, deterministic stream per grid block.
    pltpu.prng_seed(seed_ref[0], pl.program_id(0), pl.program_id(1))
    eps = pltpu.stateful_normal(x_ref.shape, jnp.float32)

    a = abar_ref[...]                       # (tb, 1), broadcasts across lanes
    first = jnp.sqrt(a) * x_ref[...]
    second = jnp.sqrt(1.0 - a) * eps

    noisy_ref[...] = first + second
    eps_ref[...] = eps
    first_ref[...] = first
    second_ref[...] = second


@jax.jit
def _run_fused(x_flat, abar_col, seed):
    """x_flat: (B, N) f32; abar_col: (B, 1) f32; seed: (1,) int32."""
    B, N = x_flat.shape
    tile_budget, vmem_limit = _vmem_budget()
    tb, tn = _choose_block(B, N, tile_budget)

    data_spec = pl.BlockSpec((tb, tn), lambda i, j, seed_ref: (i, j))
    coef_spec = pl.BlockSpec((tb, 1), lambda i, j, seed_ref: (i, 0))
    out_sd = jax.ShapeDtypeStruct((B, N), jnp.float32)

    return pl.pallas_call(
        _fused_rng_kernel,
        out_shape=(out_sd, out_sd, out_sd, out_sd),
        grid_spec=pltpu.PrefetchScalarGridSpec(
            num_scalar_prefetch=1,
            grid=(pl.cdiv(B, tb), pl.cdiv(N, tn)),
            in_specs=[coef_spec, data_spec],
            out_specs=(data_spec, data_spec, data_spec, data_spec),
        ),
        compiler_params=pltpu.CompilerParams(
            dimension_semantics=("parallel", "parallel"),
            vmem_limit_bytes=vmem_limit,
        ),
    )(seed, abar_col, x_flat)


# --------------------------------------------------------------------------
# Fallback kernel: eps produced by jax.random and read by the kernel
# (one extra HBM pass).  Only used if the in-kernel PRNG path is unavailable.
# --------------------------------------------------------------------------
def _eps_input_kernel(abar_ref, x_ref, eps_ref, noisy_ref, first_ref, second_ref):
    a = abar_ref[...]
    first = jnp.sqrt(a) * x_ref[...]
    second = jnp.sqrt(1.0 - a) * eps_ref[...]
    noisy_ref[...] = first + second
    first_ref[...] = first
    second_ref[...] = second


@jax.jit
def _run_eps_input(x_flat, eps_flat, abar_col):
    B, N = x_flat.shape
    tile_budget, vmem_limit = _vmem_budget()
    tb, tn = _choose_block(B, N, tile_budget)

    data_spec = pl.BlockSpec((tb, tn), lambda i, j: (i, j))
    coef_spec = pl.BlockSpec((tb, 1), lambda i, j: (i, 0))
    out_sd = jax.ShapeDtypeStruct((B, N), jnp.float32)

    return pl.pallas_call(
        _eps_input_kernel,
        out_shape=(out_sd, out_sd, out_sd),
        grid=(pl.cdiv(B, tb), pl.cdiv(N, tn)),
        in_specs=[coef_spec, data_spec, data_spec],
        out_specs=(data_spec, data_spec, data_spec),
        compiler_params=pltpu.CompilerParams(
            dimension_semantics=("parallel", "parallel"),
            vmem_limit_bytes=vmem_limit,
        ),
    )(abar_col, x_flat, eps_flat)


class LinearNoiseScheduler:
    """JAX/Pallas port of the PyTorch LinearNoiseScheduler forward pass."""

    _fused_rng_ok = True        # flips to False if the RNG kernel won't lower/run
    _fused_rng_verified = False # first fused call is synced to catch runtime errors

    def __init__(self, timesteps: int = 1000, beta_start: float = 1e-4,
                 beta_end: float = 0.02):
        self.timesteps = timesteps
        self.beta_start = beta_start
        self.beta_end = beta_end
        self.betas = jnp.linspace(beta_start, beta_end, timesteps, dtype=jnp.float32)
        self.alphas = 1.0 - self.betas
        self.alpha_hat = jnp.cumprod(self.alphas, axis=0)

    def __call__(self, x0: jnp.ndarray, t: jnp.ndarray, key: jax.Array):
        """
        x0: [B, C, H, W] float32 (NCHW), t: [B] int32 timesteps.
        Returns (noisy_images, epsilon, first_term, second_term), all [B,C,H,W].
        """
        x0 = x0.astype(jnp.float32)
        B, C, H, W = x0.shape
        N = C * H * W

        # Per-batch alpha_bar_t as a (B, 1) column; the .view(-1,1,1,1)
        # broadcast happens inside the kernel across the lane dim.
        abar_col = self.alpha_hat[t].astype(jnp.float32).reshape(B, 1)
        # Lane-dense flat view; contiguous NCHW -> (B, N) reshape is free.
        x_flat = x0.reshape(B, N)

        noisy_f = eps_f = first_f = second_f = None
        if LinearNoiseScheduler._fused_rng_ok:
            try:
                # Per-call seed derived from the caller's key (the eps stream
                # is the TPU hardware PRNG, not jax.random's bitstream).
                seed = jax.random.randint(
                    key, (1,), jnp.iinfo(jnp.int32).min, jnp.iinfo(jnp.int32).max,
                    dtype=jnp.int32)
                outs = _run_fused(x_flat, abar_col, seed)
                if not LinearNoiseScheduler._fused_rng_verified:
                    outs = jax.block_until_ready(outs)
                    LinearNoiseScheduler._fused_rng_verified = True
                noisy_f, eps_f, first_f, second_f = outs
            except Exception:
                LinearNoiseScheduler._fused_rng_ok = False

        if not LinearNoiseScheduler._fused_rng_ok:
            eps_f = jax.random.normal(key, (B, N), dtype=jnp.float32)
            noisy_f, first_f, second_f = _run_eps_input(x_flat, eps_f, abar_col)

        def unflatten(a):
            return a.reshape(B, C, H, W)

        return unflatten(noisy_f), unflatten(eps_f), unflatten(first_f), unflatten(second_f)


if __name__ == "__main__":
    key = jax.random.PRNGKey(0)
    k_x, k_t, k_eps = jax.random.split(key, 3)

    B, C, H, W = 2, 4, 16, 16
    x0 = jax.random.normal(k_x, (B, C, H, W), dtype=jnp.float32)
    t = jax.random.randint(k_t, (B,), 0, 1000, dtype=jnp.int32)

    sched = LinearNoiseScheduler(timesteps=1000, beta_start=1e-4, beta_end=0.02)
    noisy, eps, first, second = sched(x0, t, k_eps)
    jax.block_until_ready((noisy, eps, first, second))

    # Reference check in plain JAX against the *returned* eps (the kernel may
    # draw eps from the on-chip PRNG, so there is no external stream to match).
    abar = sched.alpha_hat[t].reshape(-1, 1, 1, 1)
    ref_first = jnp.sqrt(abar) * x0
    ref_second = jnp.sqrt(1.0 - abar) * eps
    ref_noisy = ref_first + ref_second
    assert noisy.shape == x0.shape and eps.shape == x0.shape
    assert jnp.allclose(first, ref_first, atol=1e-5)
    assert jnp.allclose(second, ref_second, atol=1e-5)
    assert jnp.allclose(noisy, ref_noisy, atol=1e-5)

    # Loose distributional sanity check on eps (2048 samples, ~9-sigma bounds).
    assert abs(float(jnp.mean(eps))) < 0.2
    assert abs(float(jnp.std(eps)) - 1.0) < 0.2

    print("KERNEL_OK")
</pallas_src>

<mosaic_0001>
module attributes {stable_mosaic.version = 11 : i64} {
  func.func @_fused_rng_kernel(%arg0: i32, %arg1: i32, %arg2: memref<1xi32, #tpu.memory_space<smem>>, %arg3: memref<2x1xf32, #tpu.memory_space<vmem>>, %arg4: memref<2x1024xf32, #tpu.memory_space<vmem>>, %arg5: memref<2x1024xf32, #tpu.memory_space<vmem>>, %arg6: memref<2x1024xf32, #tpu.memory_space<vmem>>, %arg7: memref<2x1024xf32, #tpu.memory_space<vmem>>, %arg8: memref<2x1024xf32, #tpu.memory_space<vmem>>) attributes {dimension_semantics = [#tpu.dimension_semantics<parallel>, #tpu.dimension_semantics<parallel>], iteration_bounds = array<i64: 1, 1>, scalar_prefetch = 1 : i64, scratch_operands = 0 : i64, tpu.core_type = #tpu.core_type<tc>, window_params = [{transform_indices = @transform_0, window_bounds = array<i64: 2, 1>}, {transform_indices = @transform_1, window_bounds = array<i64: 2, 1024>}, {transform_indices = @transform_2, window_bounds = array<i64: 2, 1024>}, {transform_indices = @transform_3, window_bounds = array<i64: 2, 1024>}, {transform_indices = @transform_4, window_bounds = array<i64: 2, 1024>}, {transform_indices = @transform_5, window_bounds = array<i64: 2, 1024>}]} {
    %c0 = arith.constant 0 : index
    %0 = memref.load %arg2[%c0] : memref<1xi32, #tpu.memory_space<smem>>
    "tpu.prng_set_seed_32"(%0, %arg0, %arg1) : (i32, i32, i32) -> ()
    %c0_i32 = arith.constant 0 : i32
    %c0_i32_0 = arith.constant 0 : i32
    %cst = arith.constant -0.99999994 : f32
    %cst_1 = arith.constant 1.000000e+00 : f32
    %1 = vector.broadcast %cst : f32 to vector<1x1xf32>
    %2 = vector.broadcast %cst_1 : f32 to vector<1x1xf32>
    %3 = "tpu.prng_random_bits"() : () -> vector<2x1024xi32>
    %c9_i32 = arith.constant 9 : i32
    %4 = vector.broadcast %c9_i32 : i32 to vector<2x1024xi32>
    %5 = arith.shrui %3, %4 : vector<2x1024xi32>
    %c1065353216_i32 = arith.constant 1065353216 : i32
    %6 = vector.broadcast %c1065353216_i32 : i32 to vector<2x1024xi32>
    %7 = arith.ori %5, %6 : vector<2x1024xi32>
    %8 = tpu.bitcast %7 : vector<2x1024xi32> -> vector<2x1024xf32>
    %cst_2 = arith.constant 1.000000e+00 : f32
    %9 = vector.broadcast %cst_2 : f32 to vector<2x1024xf32>
    %10 = arith.subf %8, %9 : vector<2x1024xf32>
    %11 = arith.subf %2, %1 : vector<1x1xf32>
    %12 = vector.broadcast %11 : vector<1x1xf32> to vector<2x1024xf32>
    %13 = arith.mulf %10, %12 : vector<2x1024xf32>
    %14 = vector.broadcast %1 : vector<1x1xf32> to vector<2x1024xf32>
    %15 = arith.addf %13, %14 : vector<2x1024xf32>
    %16 = vector.broadcast %1 : vector<1x1xf32> to vector<2x1024xf32>
    %17 = arith.maximumf %16, %15 : vector<2x1024xf32>
    %cst_3 = arith.constant 0.000000e+00 : f32
    %18 = vector.broadcast %cst_3 : f32 to vector<2x1024xf32>
    %19 = arith.subf %18, %17 : vector<2x1024xf32>
    %20 = arith.mulf %17, %19 : vector<2x1024xf32>
    %21 = math.log1p %20 : vector<2x1024xf32>
    %cst_4 = arith.constant 0.000000e+00 : f32
    %22 = vector.broadcast %cst_4 : f32 to vector<2x1024xf32>
    %23 = arith.subf %22, %21 : vector<2x1024xf32>
    %cst_5 = arith.constant 5.000000e+00 : f32
    %24 = vector.broadcast %cst_5 : f32 to vector<2x1024xf32>
    %25 = arith.cmpf olt, %23, %24 : vector<2x1024xf32>
    %cst_6 = arith.constant 2.500000e+00 : f32
    %26 = vector.broadcast %cst_6 : f32 to vector<2x1024xf32>
    %27 = arith.subf %23, %26 : vector<2x1024xf32>
    %28 = math.sqrt %23 : vector<2x1024xf32>
    %cst_7 = arith.constant 3.000000e+00 : f32
    %29 = vector.broadcast %cst_7 : f32 to vector<2x1024xf32>
    %30 = arith.subf %28, %29 : vector<2x1024xf32>
    %31 = arith.select %25, %27, %30 : vector<2x1024xi1>, vector<2x1024xf32>
    %cst_8 = arith.constant 2.81022636E-8 : f32
    %cst_9 = arith.constant -2.00214257E-4 : f32
    %32 = vector.broadcast %cst_8 : f32 to vector<2x1024xf32>
    %33 = vector.broadcast %cst_9 : f32 to vector<2x1024xf32>
    %34 = arith.select %25, %32, %33 : vector<2x1024xi1>, vector<2x1024xf32>
    %cst_10 = arith.constant 3.43273939E-7 : f32
    %cst_11 = arith.constant 1.00950558E-4 : f32
    %35 = vector.broadcast %cst_10 : f32 to vector<2x1024xf32>
    %36 = vector.broadcast %cst_11 : f32 to vector<2x1024xf32>
    %37 = arith.select %25, %35, %36 : vector<2x1024xi1>, vector<2x1024xf32>
    %38 = arith.mulf %34, %31 : vector<2x1024xf32>
    %39 = arith.addf %37, %38 : vector<2x1024xf32>
    %cst_12 = arith.constant -3.5233877E-6 : f32
    %cst_13 = arith.constant 0.00134934322 : f32
    %40 = vector.broadcast %cst_12 : f32 to vector<2x1024xf32>
    %41 = vector.broadcast %cst_13 : f32 to vector<2x1024xf32>
    %42 = arith.select %25, %40, %41 : vector<2x1024xi1>, vector<2x1024xf32>
    %43 = arith.mulf %39, %31 : vector<2x1024xf32>
    %44 = arith.addf %42, %43 : vector<2x1024xf32>
    %cst_14 = arith.constant -4.39150654E-6 : f32
    %cst_15 = arith.constant -0.00367342844 : f32
    %45 = vector.broadcast %cst_14 : f32 to vector<2x1024xf32>
    %46 = vector.broadcast %cst_15 : f32 to vector<2x1024xf32>
    %47 = arith.select %25, %45, %46 : vector<2x1024xi1>, vector<2x1024xf32>
    %48 = arith.mulf %44, %31 : vector<2x1024xf32>
    %49 = arith.addf %47, %48 : vector<2x1024xf32>
    %cst_16 = arith.constant 2.1858087E-4 : f32
    %cst_17 = arith.constant 0.00573950773 : f32
    %50 = vector.broadcast %cst_16 : f32 to vector<2x1024xf32>
    %51 = vector.broadcast %cst_17 : f32 to vector<2x1024xf32>
    %52 = arith.select %25, %50, %51 : vector<2x1024xi1>, vector<2x1024xf32>
    %53 = arith.mulf %49, %31 : vector<2x1024xf32>
    %54 = arith.addf %52, %53 : vector<2x1024xf32>
    %cst_18 = arith.constant -0.00125372503 : f32
    %cst_19 = arith.constant -0.0076224613 : f32
    %55 = vector.broadcast %cst_18 : f32 to vector<2x1024xf32>
    %56 = vector.broadcast %cst_19 : f32 to vector<2x1024xf32>
    %57 = arith.select %25, %55, %56 : vector<2x1024xi1>, vector<2x1024xf32>
    %58 = arith.mulf %54, %31 : vector<2x1024xf32>
    %59 = arith.addf %57, %58 : vector<2x1024xf32>
    %cst_20 = arith.constant -0.00417768164 : f32
    %cst_21 = arith.constant 0.00943887047 : f32
    %60 = vector.broadcast %cst_20 : f32 to vector<2x1024xf32>
    %61 = vector.broadcast %cst_21 : f32 to vector<2x1024xf32>
    %62 = arith.select %25, %60, %61 : vector<2x1024xi1>, vector<2x1024xf32>
    %63 = arith.mulf %59, %31 : vector<2x1024xf32>
    %64 = arith.addf %62, %63 : vector<2x1024xf32>
    %cst_22 = arith.constant 0.246640727 : f32
    %cst_23 = arith.constant 1.00167406 : f32
    %65 = vector.broadcast %cst_22 : f32 to vector<2x1024xf32>
    %66 = vector.broadcast %cst_23 : f32 to vector<2x1024xf32>
    %67 = arith.select %25, %65, %66 : vector<2x1024xi1>, vector<2x1024xf32>
    %68 = arith.mulf %64, %31 : vector<2x1024xf32>
    %69 = arith.addf %67, %68 : vector<2x1024xf32>
    %cst_24 = arith.constant 1.50140941 : f32
    %cst_25 = arith.constant 2.83297682 : f32
    %70 = vector.broadcast %cst_24 : f32 to vector<2x1024xf32>
    %71 = vector.broadcast %cst_25 : f32 to vector<2x1024xf32>
    %72 = arith.select %25, %70, %71 : vector<2x1024xi1>, vector<2x1024xf32>
    %73 = arith.mulf %69, %31 : vector<2x1024xf32>
    %74 = arith.addf %72, %73 : vector<2x1024xf32>
    %75 = math.absf %17 : vector<2x1024xf32>
    %cst_26 = arith.constant 1.000000e+00 : f32
    %76 = vector.broadcast %cst_26 : f32 to vector<2x1024xf32>
    %77 = arith.cmpf oeq, %75, %76 : vector<2x1024xf32>
    %cst_27 = arith.constant 0x7F800000 : f32
    %78 = vector.broadcast %cst_27 : f32 to vector<2x1024xf32>
    %79 = arith.mulf %78, %17 : vector<2x1024xf32>
    %80 = arith.mulf %74, %17 : vector<2x1024xf32>
    %81 = arith.select %77, %79, %80 : vector<2x1024xi1>, vector<2x1024xf32>
    %cst_28 = arith.constant 1.41421354 : f32
    %82 = vector.broadcast %cst_28 : f32 to vector<2x1024xf32>
    %83 = arith.mulf %82, %81 : vector<2x1024xf32>
    %c0_29 = arith.constant 0 : index
    %c0_30 = arith.constant 0 : index
    %84 = vector.load %arg3[%c0_29, %c0_30] : memref<2x1xf32, #tpu.memory_space<vmem>>, vector<2x1xf32>
    %85 = math.sqrt %84 : vector<2x1xf32>
    %c0_31 = arith.constant 0 : index
    %c0_32 = arith.constant 0 : index
    %86 = vector.load %arg4[%c0_31, %c0_32] : memref<2x1024xf32, #tpu.memory_space<vmem>>, vector<2x1024xf32>
    %87 = vector.broadcast %85 : vector<2x1xf32> to vector<2x1024xf32>
    %88 = arith.mulf %87, %86 : vector<2x1024xf32>
    %cst_33 = arith.constant 1.000000e+00 : f32
    %89 = vector.broadcast %cst_33 : f32 to vector<2x1xf32>
    %90 = arith.subf %89, %84 : vector<2x1xf32>
    %91 = math.sqrt %90 : vector<2x1xf32>
    %92 = vector.broadcast %91 : vector<2x1xf32> to vector<2x1024xf32>
    %93 = arith.mulf %92, %83 : vector<2x1024xf32>
    %94 = arith.addf %88, %93 : vector<2x1024xf32>
    %c0_34 = arith.constant 0 : index
    %c0_35 = arith.constant 0 : index
    %95 = vector.load %arg5[%c0_34, %c0_35] : memref<2x1024xf32, #tpu.memory_space<vmem>>, vector<2x1024xf32>
    tpu.vector_store %arg5[%c0_34, %c0_35], %94 {strides = array<i32>} : memref<2x1024xf32, #tpu.memory_space<vmem>>, vector<2x1024xf32>,
    %c0_36 = arith.constant 0 : index
    %c0_37 = arith.constant 0 : index
    %96 = vector.load %arg6[%c0_36, %c0_37] : memref<2x1024xf32, #tpu.memory_space<vmem>>, vector<2x1024xf32>
    tpu.vector_store %arg6[%c0_36, %c0_37], %83 {strides = array<i32>} : memref<2x1024xf32, #tpu.memory_space<vmem>>, vector<2x1024xf32>,
    %c0_38 = arith.constant 0 : index
    %c0_39 = arith.constant 0 : index
    %97 = vector.load %arg7[%c0_38, %c0_39] : memref<2x1024xf32, #tpu.memory_space<vmem>>, vector<2x1024xf32>
    tpu.vector_store %arg7[%c0_38, %c0_39], %88 {strides = array<i32>} : memref<2x1024xf32, #tpu.memory_space<vmem>>, vector<2x1024xf32>,
    %c0_40 = arith.constant 0 : index
    %c0_41 = arith.constant 0 : index
    %98 = vector.load %arg8[%c0_40, %c0_41] : memref<2x1024xf32, #tpu.memory_space<vmem>>, vector<2x1024xf32>
    tpu.vector_store %arg8[%c0_40, %c0_41], %93 {strides = array<i32>} : memref<2x1024xf32, #tpu.memory_space<vmem>>, vector<2x1024xf32>,
    return
  }
  func.func @transform_0(%arg0: i32, %arg1: i32, %arg2: memref<1xi32, #tpu.memory_space<smem>>) -> (i32, i32) {
    %c0_i32 = arith.constant 0 : i32
    %c0_i32_0 = arith.constant 0 : i32
    return %arg0, %c0_i32 : i32, i32
  }
  func.func @transform_1(%arg0: i32, %arg1: i32, %arg2: memref<1xi32, #tpu.memory_space<smem>>) -> (i32, i32) {
    %c0_i32 = arith.constant 0 : i32
    return %arg0, %arg1 : i32, i32
  }
  func.func @transform_2(%arg0: i32, %arg1: i32, %arg2: memref<1xi32, #tpu.memory_space<smem>>) -> (i32, i32) {
    %c0_i32 = arith.constant 0 : i32
    return %arg0, %arg1 : i32, i32
  }
  func.func @transform_3(%arg0: i32, %arg1: i32, %arg2: memref<1xi32, #tpu.memory_space<smem>>) -> (i32, i32) {
    %c0_i32 = arith.constant 0 : i32
    return %arg0, %arg1 : i32, i32
  }
  func.func @transform_4(%arg0: i32, %arg1: i32, %arg2: memref<1xi32, #tpu.memory_space<smem>>) -> (i32, i32) {
    %c0_i32 = arith.constant 0 : i32
    return %arg0, %arg1 : i32, i32
  }
  func.func @transform_5(%arg0: i32, %arg1: i32, %arg2: memref<1xi32, #tpu.memory_space<smem>>) -> (i32, i32) {
    %c0_i32 = arith.constant 0 : i32
    return %arg0, %arg1 : i32, i32
  }
}

module attributes {stable_mosaic.version = 11 : i64} {
  func.func @_eps_input_kernel(%arg0: i32, %arg1: i32, %arg2: memref<2x1xf32, #tpu.memory_space<vmem>>, %arg3: memref<2x1024xf32, #tpu.memory_space<vmem>>, %arg4: memref<2x1024xf32, #tpu.memory_space<vmem>>, %arg5: memref<2x1024xf32, #tpu.memory_space<vmem>>, %arg6: memref<2x1024xf32, #tpu.memory_space<vmem>>, %arg7: memref<2x1024xf32, #tpu.memory_space<vmem>>) attributes {dimension_semantics = [#tpu.dimension_semantics<parallel>, #tpu.dimension_semantics<parallel>], iteration_bounds = array<i64: 1, 1>, scalar_prefetch = 0 : i64, scratch_operands = 0 : i64, tpu.core_type = #tpu.core_type<tc>, window_params = [{transform_indices = @transform_0, window_bounds = array<i64: 2, 1>}, {transform_indices = @transform_1, window_bounds = array<i64: 2, 1024>}, {transform_indices = @transform_2, window_bounds = array<i64: 2, 1024>}, {transform_indices = @transform_3, window_bounds = array<i64: 2, 1024>}, {transform_indices = @transform_4, window_bounds = array<i64: 2, 1024>}, {transform_indices = @transform_5, window_bounds = array<i64: 2, 1024>}]} {
    %c0 = arith.constant 0 : index
    %c0_0 = arith.constant 0 : index
    %0 = vector.load %arg2[%c0, %c0_0] : memref<2x1xf32, #tpu.memory_space<vmem>>, vector<2x1xf32>
    %1 = math.sqrt %0 : vector<2x1xf32>
    %c0_1 = arith.constant 0 : index
    %c0_2 = arith.constant 0 : index
    %2 = vector.load %arg3[%c0_1, %c0_2] : memref<2x1024xf32, #tpu.memory_space<vmem>>, vector<2x1024xf32>
    %3 = vector.broadcast %1 : vector<2x1xf32> to vector<2x1024xf32>
    %4 = arith.mulf %3, %2 : vector<2x1024xf32>
    %cst = arith.constant 1.000000e+00 : f32
    %5 = vector.broadcast %cst : f32 to vector<2x1xf32>
    %6 = arith.subf %5, %0 : vector<2x1xf32>
    %7 = math.sqrt %6 : vector<2x1xf32>
    %c0_3 = arith.constant 0 : index
    %c0_4 = arith.constant 0 : index
    %8 = vector.load %arg4[%c0_3, %c0_4] : memref<2x1024xf32, #tpu.memory_space<vmem>>, vector<2x1024xf32>
    %9 = vector.broadcast %7 : vector<2x1xf32> to vector<2x1024xf32>
    %10 = arith.mulf %9, %8 : vector<2x1024xf32>
    %11 = arith.addf %4, %10 : vector<2x1024xf32>
    %c0_5 = arith.constant 0 : index
    %c0_6 = arith.constant 0 : index
    %12 = vector.load %arg5[%c0_5, %c0_6] : memref<2x1024xf32, #tpu.memory_space<vmem>>, vector<2x1024xf32>
    tpu.vector_store %arg5[%c0_5, %c0_6], %11 {strides = array<i32>} : memref<2x1024xf32, #tpu.memory_space<vmem>>, vector<2x1024xf32>,
    %c0_7 = arith.constant 0 : index
    %c0_8 = arith.constant 0 : index
    %13 = vector.load %arg6[%c0_7, %c0_8] : memref<2x1024xf32, #tpu.memory_space<vmem>>, vector<2x1024xf32>
    tpu.vector_store %arg6[%c0_7, %c0_8], %4 {strides = array<i32>} : memref<2x1024xf32, #tpu.memory_space<vmem>>, vector<2x1024xf32>,
    %c0_9 = arith.constant 0 : index
    %c0_10 = arith.constant 0 : index
    %14 = vector.load %arg7[%c0_9, %c0_10] : memref<2x1024xf32, #tpu.memory_space<vmem>>, vector<2x1024xf32>
    tpu.vector_store %arg7[%c0_9, %c0_10], %10 {strides = array<i32>} : memref<2x1024xf32, #tpu.memory_space<vmem>>, vector<2x1024xf32>,
    return
  }
  func.func @transform_0(%arg0: i32, %arg1: i32) -> (i32, i32) {
    %c0_i32 = arith.constant 0 : i32
    %c0_i32_0 = arith.constant 0 : i32
    return %arg0, %c0_i32 : i32, i32
  }
  func.func @transform_1(%arg0: i32, %arg1: i32) -> (i32, i32) {
    %c0_i32 = arith.constant 0 : i32
    return %arg0, %arg1 : i32, i32
  }
  func.func @transform_2(%arg0: i32, %arg1: i32) -> (i32, i32) {
    %c0_i32 = arith.constant 0 : i32
    return %arg0, %arg1 : i32, i32
  }
  func.func @transform_3(%arg0: i32, %arg1: i32) -> (i32, i32) {
    %c0_i32 = arith.constant 0 : i32
    return %arg0, %arg1 : i32, i32
  }
  func.func @transform_4(%arg0: i32, %arg1: i32) -> (i32, i32) {
    %c0_i32 = arith.constant 0 : i32
    return %arg0, %arg1 : i32, i32
  }
  func.func @transform_5(%arg0: i32, %arg1: i32) -> (i32, i32) {
    %c0_i32 = arith.constant 0 : i32
    return %arg0, %arg1 : i32, i32
  }
}

</mosaic_0001>

<llo_original>
// kernel: _run_eps_input.1
$region0: #{_run_eps_input.1}
  #allocation0 [shape = 'u32[]', space=smem, size = 0x4, offset = 0x4, fixed_abs, tag = 'smem constant byte address 0x4 - core index']
  #allocation1 [shape = 'u32[72,128]{1,0:T(1,128)}', space=vmem, size = 0x9000, scoped, tag = 'internal scratch']
  %s0 = inlined_call_operand.vmem [shape: f32[2,1], index: 0, kind: input, shape index: {}]
  %s1 = inlined_call_operand.hbm [shape: f32[2,1024], index: 1, kind: input, shape index: {}]
  %s2 = inlined_call_operand.hbm [shape: f32[2,1024], index: 2, kind: input, shape index: {}]
  %s3 = inlined_call_operand.hbm [shape: f32[2,1024], index: 3, kind: output, shape index: {0}]
  %s4 = inlined_call_operand.hbm [shape: f32[2,1024], index: 4, kind: output, shape index: {1}]
  %s5 = inlined_call_operand.hbm [shape: f32[2,1024], index: 5, kind: output, shape index: {2}]
  %6 = xla_tuple %s3, %s4, %s5
  %s7 = sld [smem:[#allocation0]]
  $region46: #{_run_eps_input.1} parent=0
    _
  %s9 = ssub.s32 1, %s7
  %s10 = scalar_select 0, %s9, %s7
  $region1: #{_run_eps_input.1} parent=0
    #allocation2 [shape = 'u8[8192]{0}', space=vmem, size = 0x2000, scoped, tag = 'input window, operand 1, single buffered']
    #allocation3 [shape = 's32[1]{0}', space=sflag, size = 0x4, scoped, tag = 'scoped memory for _run_eps_input.1']
    #allocation4 [shape = 's32[1]{0}', space=sflag, size = 0x4, scoped, tag = 'scoped memory for _run_eps_input.1']
    #allocation5 [shape = 'u8[8192]{0}', space=vmem, size = 0x2000, scoped, tag = 'input window, operand 2, single buffered']
    #allocation6 [shape = 's32[1]{0}', space=sflag, size = 0x4, scoped, tag = 'scoped memory for _run_eps_input.1']
    #allocation7 [shape = 'u8[8192]{0}', space=vmem, size = 0x2000, scoped, tag = 'output window, operand 0, single buffered']
    #allocation8 [shape = 'u8[8192]{0}', space=vmem, size = 0x2000, scoped, tag = 'output window, operand 1, single buffered']
    #allocation9 [shape = 's32[1]{0}', space=sflag, size = 0x4, scoped, tag = 'scoped memory for _run_eps_input.1']
    #allocation10 [shape = 'u8[8192]{0}', space=vmem, size = 0x2000, scoped, tag = 'output window, operand 2, single buffered']
    %11 = vsyncpa [#allocation3], 0
    %12 = vsyncpa [#allocation6], 0
    %13 = vsyncpa [#allocation4], 0
    %14 = vsyncpa [#allocation9], 0
    // Predicated region
    $region2: #{_run_eps_input.1} parent=1 // pred_check
      _
    $region3: #{_run_eps_input.1} parent=1 // pred_check_branch
      %16 = sbr.rel (0) target = $region5
    $region4: #{_run_eps_input.1} parent=1 // pred_region
      _
    $region5: #{_run_eps_input.1} parent=1 // pred_fallthru
      _
    // Predicated region
    $region6: #{_run_eps_input.1} parent=1 // pred_check
      _
    $region7: #{_run_eps_input.1} parent=1 // pred_check_branch
      %18 = sbr.rel (0) target = $region9
    $region8: #{_run_eps_input.1} parent=1 // pred_region
      %20 = vsyncadd [#allocation3], 0
      %s22 = sshll.u32 %s1, 4
      %s23 = int_to_ptr.hbm [resolvable:$true] %s22
      %s24 = sshll.u32 [#allocation2], 4
      %s25 = int_to_ptr.vmem [resolvable:$true] %s24
      %27 = dma.hbm_to_vmem [thread:$0]  %s23, 256, %s25, [#allocation3]
    $region9: #{_run_eps_input.1} parent=1 // pred_fallthru
      _
    // Predicated region
    $region10: #{_run_eps_input.1} parent=1 // pred_check
      _
    $region11: #{_run_eps_input.1} parent=1 // pred_check_branch
      %29 = sbr.rel (0) target = $region13
    $region12: #{_run_eps_input.1} parent=1 // pred_region
      %31 = vsyncadd [#allocation6], 0
      %s33 = sshll.u32 %s2, 4
      %s34 = int_to_ptr.hbm [resolvable:$true] %s33
      %s35 = sshll.u32 [#allocation5], 4
      %s36 = int_to_ptr.vmem [resolvable:$true] %s35
      %38 = dma.hbm_to_vmem [thread:$0]  %s34, 256, %s36, [#allocation6]
    $region13: #{_run_eps_input.1} parent=1 // pred_fallthru
      _
    // Predicated region
    $region14: #{_run_eps_input.1} parent=1 // pred_check
      _
    $region15: #{_run_eps_input.1} parent=1 // pred_check_branch
      %40 = sbr.rel (0) target = $region17
    $region16: #{_run_eps_input.1} parent=1 // pred_region
      %42 = dma.done [#allocation3], 256
    $region17: #{_run_eps_input.1} parent=1 // pred_fallthru
      _
    // Predicated region
    $region18: #{_run_eps_input.1} parent=1 // pred_check
      _
    $region19: #{_run_eps_input.1} parent=1 // pred_check_branch
      %44 = sbr.rel (0) target = $region21
    $region20: #{_run_eps_input.1} parent=1 // pred_region
      %46 = dma.done [#allocation6], 256
    $region21: #{_run_eps_input.1} parent=1 // pred_fallthru
      _
    %v47 = vld [vmem:[%s0] sm:$0x3]
    %v48 = vrsqrt.pop %v47
    %v49 = vmul.f32 %v48, %v47
    %v50 = vmul.f32 %v49, %v48
    %v51 = vmul.f32 0.5, %v50
    %v52 = vsub.f32 1.5, %v51
    %v53 = vmul.f32 %v48, %v52
    %v54 = vmul.f32 %v47, %v53
    %vm55 = vcmp.eq.f32.partialorder %v47, inf
    %v56 = vsel %vm55, %v47, %v54
    %vm57 = vcmp.eq.f32.partialorder %v47, 0.0
    %v58 = vand.u32 %v47, 2147483648
    %v59 = vsel %vm57, %v58, %v56
    %v60 = vld [vmem:[#allocation2] sm:$0xff]
    %v61 = vld [vmem:[#allocation2 + $0x8] sm:$0xff]
    %63 = vset.pattern.permute.xlu0 0
    %64 = vperm.xlu0 %63, %v59
    %v65 = vpop.permute.xlu0 %64
    %69 = vst [vmem:[#allocation1] ss:$4 sm:$0xff] %v60
    %s70 = scalar_lea.vmem [#allocation1], 32
    %71 = vst [vmem:[%s70] ss:$4 sm:$0xff] %v61
    %v72 = vld.sshfl [vmem:[#allocation1] sm:$0xff pattern:$0x73625140]
    %v73 = vld.sshfl [vmem:[#allocation1 + $0x8] sm:$0xff pattern:$0x73625140]
    %v74 = vld.sshfl [vmem:[#allocation1 + $0x10] sm:$0xff pattern:$0x73625140]
    %v75 = vld.sshfl [vmem:[#allocation1 + $0x18] sm:$0xff pattern:$0x73625140]
    %v76 = vld.sshfl [vmem:[#allocation1 + $0x20] sm:$0xff pattern:$0x73625140]
    %v77 = vld.sshfl [vmem:[#allocation1 + $0x28] sm:$0xff pattern:$0x73625140]
    %v78 = vld.sshfl [vmem:[#allocation1 + $0x30] sm:$0xff pattern:$0x73625140]
    %v79 = vld.sshfl [vmem:[#allocation1 + $0x38] sm:$0xff pattern:$0x73625140]
    %v88 = vmul.f32 %v65, %v72
    %v89 = vmul.f32 %v65, %v73
    %v90 = vmul.f32 %v65, %v74
    %v91 = vmul.f32 %v65, %v75
    %v92 = vmul.f32 %v65, %v76
    %v93 = vmul.f32 %v65, %v77
    %v94 = vmul.f32 %v65, %v78
    %v95 = vmul.f32 %v65, %v79
    %v96 = vsub.f32 1.0, %v47
    %v97 = vrsqrt.pop %v96
    %v98 = vmul.f32 %v97, %v96
    %v99 = vmul.f32 %v98, %v97
    %v100 = vmul.f32 0.5, %v99
    %v101 = vsub.f32 1.5, %v100
    %v102 = vmul.f32 %v97, %v101
    %v103 = vmul.f32 %v96, %v102
    %vm104 = vcmp.eq.f32.partialorder %v96, inf
    %v105 = vsel %vm104, %v96, %v103
    %vm106 = vcmp.eq.f32.partialorder %v96, 0.0
    %v107 = vand.u32 %v96, 2147483648
    %v108 = vsel %vm106, %v107, %v105
    %v109 = vld [vmem:[#allocation5] sm:$0xff]
    %v110 = vld [vmem:[#allocation5 + $0x8] sm:$0xff]
    %112 = vset.pattern.permute.xlu0 0
    %113 = vperm.xlu0 %112, %v108
    %v114 = vpop.permute.xlu0 %113
    %118 = vst [vmem:[#allocation1] ss:$4 sm:$0xff] %v109
    %s119 = scalar_lea.vmem [#allocation1], 32
    %120 = vst [vmem:[%s119] ss:$4 sm:$0xff] %v110
    %v121 = vld.sshfl [vmem:[#allocation1] sm:$0xff pattern:$0x73625140]
    %v122 = vld.sshfl [vmem:[#allocation1 + $0x8] sm:$0xff pattern:$0x73625140]
    %v123 = vld.sshfl [vmem:[#allocation1 + $0x10] sm:$0xff pattern:$0x73625140]
    %v124 = vld.sshfl [vmem:[#allocation1 + $0x18] sm:$0xff pattern:$0x73625140]
    %v125 = vld.sshfl [vmem:[#allocation1 + $0x20] sm:$0xff pattern:$0x73625140]
    %v126 = vld.sshfl [vmem:[#allocation1 + $0x28] sm:$0xff pattern:$0x73625140]
    %v127 = vld.sshfl [vmem:[#allocation1 + $0x30] sm:$0xff pattern:$0x73625140]
    %v128 = vld.sshfl [vmem:[#allocation1 + $0x38] sm:$0xff pattern:$0x73625140]
    %v137 = vmul.f32 %v114, %v121
    %v138 = vmul.f32 %v114, %v122
    %v139 = vmul.f32 %v114, %v123
    %v140 = vmul.f32 %v114, %v124
    %v141 = vmul.f32 %v114, %v125
    %v142 = vmul.f32 %v114, %v126
    %v143 = vmul.f32 %v114, %v127
    %v144 = vmul.f32 %v114, %v128
    %v145 = vadd.f32 %v88, %v137
    %v146 = vadd.f32 %v89, %v138
    %v147 = vadd.f32 %v90, %v139
    %v148 = vadd.f32 %v91, %v140
    %v149 = vadd.f32 %v92, %v141
    %v150 = vadd.f32 %v93, %v142
    %v151 = vadd.f32 %v94, %v143
    %v152 = vadd.f32 %v95, %v144
    %v161 = vrot.slane %v146, 6
    %v162 = vrot.slane %v147, 4
    %v163 = vrot.slane %v148, 2
    %v164 = vrot.slane %v150, 6
    %v165 = vrot.slane %v151, 4
    %v166 = vrot.slane %v152, 2
    %vm167 = vcmask 1041408
    %v168 = vsel %vm167, %v145, %v161
    %vm169 = vcmask 1045508
    %v170 = vsel %vm169, %v162, %v163
    %vm171 = vcmask 1043456
    %v172 = vsel %vm171, %v168, %v170
    %v173 = vsel %vm167, %v149, %v164
    %v174 = vsel %vm169, %v165, %v166
    %v175 = vsel %vm171, %v173, %v174
    %178 = vst [vmem:[#allocation7] sm:$0xff] %v172
    %179 = vst [vmem:[#allocation7 + $0x8] sm:$0xff] %v175
    %v188 = vrot.slane %v89, 6
    %v189 = vrot.slane %v90, 4
    %v190 = vrot.slane %v91, 2
    %v191 = vrot.slane %v93, 6
    %v192 = vrot.slane %v94, 4
    %v193 = vrot.slane %v95, 2
    %v194 = vsel %vm167, %v88, %v188
    %v195 = vsel %vm169, %v189, %v190
    %v196 = vsel %vm171, %v194, %v195
    %v197 = vsel %vm167, %v92, %v191
    %v198 = vsel %vm169, %v192, %v193
    %v199 = vsel %vm171, %v197, %v198
    %202 = vst [vmem:[#allocation8] sm:$0xff] %v196
    %203 = vst [vmem:[#allocation8 + $0x8] sm:$0xff] %v199
    %v212 = vrot.slane %v138, 6
    %v213 = vrot.slane %v139, 4
    %v214 = vrot.slane %v140, 2
    %v215 = vrot.slane %v142, 6
    %v216 = vrot.slane %v143, 4
    %v217 = vrot.slane %v144, 2
    %v218 = vsel %vm167, %v137, %v212
    %v219 = vsel %vm169, %v213, %v214
    %v220 = vsel %vm171, %v218, %v219
    %v221 = vsel %vm167, %v141, %v215
    %v222 = vsel %vm169, %v216, %v217
    %v223 = vsel %vm171, %v221, %v222
    %226 = vst [vmem:[#allocation10] sm:$0xff] %v220
    %227 = vst [vmem:[#allocation10 + $0x8] sm:$0xff] %v223
    // Predicated region
    $region22: #{_run_eps_input.1} parent=1 // pred_check
      _
    $region23: #{_run_eps_input.1} parent=1 // pred_check_branch
      %229 = sbr.rel (0) target = $region25
    $region24: #{_run_eps_input.1} parent=1 // pred_region
      %231 = vsyncadd [#allocation4], 0
      %s233 = sshll.u32 [#allocation7], 4
      %s234 = int_to_ptr.vmem [resolvable:$true] %s233
      %s235 = sshll.u32 %s3, 4
      %s236 = int_to_ptr.hbm [resolvable:$true] %s235
      %238 = dma.vmem_to_hbm [thread:$0]  %s234, 256, %s236, [#allocation4]
    $region25: #{_run_eps_input.1} parent=1 // pred_fallthru
      _
    // Predicated region
    $region26: #{_run_eps_input.1} parent=1 // pred_check
      _
    $region27: #{_run_eps_input.1} parent=1 // pred_check_branch
      %240 = sbr.rel (0) target = $region29
    $region28: #{_run_eps_input.1} parent=1 // pred_region
      %242 = vsyncadd [#allocation9], 0
      %s244 = sshll.u32 [#allocation8], 4
      %s245 = int_to_ptr.vmem [resolvable:$true] %s244
      %s246 = sshll.u32 %s4, 4
      %s247 = int_to_ptr.hbm [resolvable:$true] %s246
      %249 = dma.vmem_to_hbm [thread:$0]  %s245, 256, %s247, [#allocation9]
    $region29: #{_run_eps_input.1} parent=1 // pred_fallthru
      _
    // Predicated region
    $region30: #{_run_eps_input.1} parent=1 // pred_check
      _
    $region31: #{_run_eps_input.1} parent=1 // pred_check_branch
      %251 = sbr.rel (0) target = $region33
    $region32: #{_run_eps_input.1} parent=1 // pred_region
      %253 = vsyncadd [#allocation9], 0
      %s255 = sshll.u32 [#allocation10], 4
      %s256 = int_to_ptr.vmem [resolvable:$true] %s255
      %s257 = sshll.u32 %s5, 4
      %s258 = int_to_ptr.hbm [resolvable:$true] %s257
      %260 = dma.vmem_to_hbm [thread:$0]  %s256, 256, %s258, [#allocation9]
    $region33: #{_run_eps_input.1} parent=1 // pred_fallthru
      _
    // Predicated region
    $region34: #{_run_eps_input.1} parent=1 // pred_check
      _
    $region35: #{_run_eps_input.1} parent=1 // pred_check_branch
      %262 = sbr.rel (0) target = $region37
    $region36: #{_run_eps_input.1} parent=1 // pred_region
      %264 = dma.done [#allocation4], 256
    $region37: #{_run_eps_input.1} parent=1 // pred_fallthru
      _
    // Predicated region
    $region38: #{_run_eps_input.1} parent=1 // pred_check
      _
    $region39: #{_run_eps_input.1} parent=1 // pred_check_branch
      %266 = sbr.rel (0) target = $region41
    $region40: #{_run_eps_input.1} parent=1 // pred_region
      %268 = dma.done [#allocation9], 256
    $region41: #{_run_eps_input.1} parent=1 // pred_fallthru
      _
    // Predicated region
    $region42: #{_run_eps_input.1} parent=1 // pred_check
      _
    $region43: #{_run_eps_input.1} parent=1 // pred_check_branch
      %270 = sbr.rel (0) target = $region45
    $region44: #{_run_eps_input.1} parent=1 // pred_region
      %272 = dma.done [#allocation9], 256
    $region45: #{_run_eps_input.1} parent=1 // pred_fallthru
      _
    %273 = vsyncpa [#allocation3], 1
    %274 = vsyncpa [#allocation6], 1
    %275 = vsyncpa [#allocation4], 1
    %276 = vsyncpa [#allocation9], 1

</llo_original>
